<compile_context>
chip_gen: v7x
topology: tpu7x:2x2x1
jax: 0.10.0
libtpu: 0.0.40
codegen_flags: <defaults>
</compile_context>

<pallas_src>
import jax
import jax.numpy as jnp
from jax.experimental import pallas as pl
from jax.experimental.pallas import tpu as pltpu

GAMMA = 0.5
_SUBLANE = 8
# Per-buffer byte budget (x tile + lane-padded output tile). Double-buffering
# doubles it; keep the total comfortably under v5e's 16 MiB default scoped VMEM.
_TILE_BYTE_BUDGET = 6 << 20


def _round_up(v, m):
    return ((v + m - 1) // m) * m


def _choose_batch_tile(B, D):
    """Pick the batch-tile row count from a VMEM byte budget."""
    # Per-buffer VMEM cost per batch row:
    #   x row: 4*D bytes; (tb, 1) f32 output row lane-pads to 128 lanes = 512 B.
    bytes_per_row = 4 * D + 512
    tb = max(_SUBLANE, _TILE_BYTE_BUDGET // bytes_per_row)
    # Keep >= 2 grid steps when the batch can be split, so v7x's two
    # TensorCores both get work (neutral on single-TC v5e/v6e).
    if B > _SUBLANE:
        tb = min(tb, _round_up(pl.cdiv(B, 2), _SUBLANE))
    tb = _round_up(tb, _SUBLANE)
    if tb >= B:
        # Full-extent block: no (8,128) divisibility requirement applies.
        return B
    return tb


def _svm_gaussian_kernel(x_ref, sv_ref, b_ref, o_ref):
    # x_ref : (tb, D) VMEM  -- natural layout: batch on sublanes, features on lanes
    # sv_ref: (1, D)  VMEM  -- broadcasts across the sublane (batch) axis
    # b_ref : (1,)    SMEM  -- scalar bias (dummy_param)
    # o_ref : (tb, 1) VMEM
    diff = x_ref[...] - sv_ref[...]                       # (tb, D) VPU elementwise
    d2 = jnp.sum(diff * diff, axis=-1, keepdims=True)     # (tb, 1) lane reduce (XLU)
    # num_support_vectors == 1 -> sum over dim=1 of the kernel matrix is k itself.
    o_ref[...] = jnp.exp(-GAMMA * d2) - b_ref[0]          # EUP exp + store


def kernel_svm_forward(x, support_vectors, dummy_param):
    """x: (B, D) f32; support_vectors: (1, D) f32; dummy_param: (1,) f32 -> (B,) f32."""
    B, D = x.shape
    x = x.astype(jnp.float32)
    sv = support_vectors.astype(jnp.float32).reshape(1, D)
    b = dummy_param.astype(jnp.float32).reshape(1)

    tb = _choose_batch_tile(B, D)
    grid = (pl.cdiv(B, tb),)

    out = pl.pallas_call(
        _svm_gaussian_kernel,
        out_shape=jax.ShapeDtypeStruct((B, 1), jnp.float32),
        grid_spec=pltpu.PrefetchScalarGridSpec(
            num_scalar_prefetch=0,
            grid=grid,
            in_specs=[
                pl.BlockSpec((tb, D), lambda i: (i, 0)),            # streamed x tiles
                pl.BlockSpec((1, D), lambda i: (0, 0)),             # resident support vector
                pl.BlockSpec(memory_space=pltpu.MemorySpace.SMEM),  # scalar bias
            ],
            out_specs=pl.BlockSpec((tb, 1), lambda i: (i, 0)),
        ),
        compiler_params=pltpu.CompilerParams(
            dimension_semantics=("parallel",),
        ),
        cost_estimate=pl.CostEstimate(
            flops=3 * B * D + 2 * B,
            transcendentals=B,
            bytes_accessed=4 * (B * D + D + B + 1),
        ),
    )(x, sv, b)
    return out[:, 0]


if __name__ == "__main__":
    key = jax.random.PRNGKey(0)
    k_x, k_sv, k_b = jax.random.split(key, 3)

    batch, input_size = 8, 32
    x = jax.random.normal(k_x, (batch, input_size), dtype=jnp.float32)
    # Deterministic "parameters" matching nn.Parameter(torch.randn(...)) shapes.
    support_vectors = jax.random.normal(k_sv, (1, input_size), dtype=jnp.float32)
    dummy_param = jax.random.normal(k_b, (1,), dtype=jnp.float32)

    out = kernel_svm_forward(x, support_vectors, dummy_param)
    out = jax.block_until_ready(out)

    # Pure-JAX reference check (same math as the PyTorch forward).
    d2_ref = jnp.sum((x[:, None, :] - support_vectors) ** 2, axis=2)  # (B, 1)
    ref = jnp.sum(jnp.exp(-GAMMA * d2_ref), axis=1) - dummy_param      # (B,)
    assert out.shape == (batch,)
    assert jnp.allclose(out, ref, atol=1e-5, rtol=1e-5)

    print("KERNEL_OK")
</pallas_src>

<mosaic_0001>
module attributes {stable_mosaic.version = 11 : i64} {
  func.func @_svm_gaussian_kernel(%arg0: i32, %arg1: memref<8x32xf32, #tpu.memory_space<vmem>>, %arg2: memref<1x32xf32, #tpu.memory_space<vmem>>, %arg3: memref<1xf32, #tpu.memory_space<smem>>, %arg4: memref<8x1xf32, #tpu.memory_space<vmem>>) attributes {dimension_semantics = [#tpu.dimension_semantics<parallel>], iteration_bounds = array<i64: 1>, scalar_prefetch = 0 : i64, scratch_operands = 0 : i64, tpu.core_type = #tpu.core_type<tc>, window_params = [{transform_indices = @transform_0, window_bounds = array<i64: 8, 32>}, {pipeline_mode = #tpu.pipeline_mode<synchronous>, transform_indices = @transform_1, window_bounds = array<i64: 1, 32>}, {transform_indices = @transform_2, window_bounds = array<i64: 1>}, {transform_indices = @transform_3, window_bounds = array<i64: 8, 1>}]} {
    %c0 = arith.constant 0 : index
    %c0_0 = arith.constant 0 : index
    %0 = vector.load %arg1[%c0, %c0_0] : memref<8x32xf32, #tpu.memory_space<vmem>>, vector<8x32xf32>
    %c0_1 = arith.constant 0 : index
    %c0_2 = arith.constant 0 : index
    %1 = vector.load %arg2[%c0_1, %c0_2] : memref<1x32xf32, #tpu.memory_space<vmem>>, vector<1x32xf32>
    %2 = vector.broadcast %1 : vector<1x32xf32> to vector<8x32xf32>
    %3 = arith.subf %0, %2 : vector<8x32xf32>
    %4 = arith.mulf %3, %3 : vector<8x32xf32>
    %cst = arith.constant dense<0.000000e+00> : vector<8xf32>
    %5 = vector.multi_reduction <add>, %4, %cst [1] : vector<8x32xf32> to vector<8xf32>
    %6 = vector.shape_cast %5 : vector<8xf32> to vector<8x1xf32>
    %cst_3 = arith.constant -5.000000e-01 : f32
    %7 = vector.broadcast %cst_3 : f32 to vector<8x1xf32>
    %8 = arith.mulf %7, %6 : vector<8x1xf32>
    %9 = math.exp %8 : vector<8x1xf32>
    %c0_4 = arith.constant 0 : index
    %10 = memref.load %arg3[%c0_4] : memref<1xf32, #tpu.memory_space<smem>>
    %11 = vector.broadcast %10 : f32 to vector<8x1xf32>
    %12 = arith.subf %9, %11 : vector<8x1xf32>
    %c0_5 = arith.constant 0 : index
    %c0_6 = arith.constant 0 : index
    %13 = vector.load %arg4[%c0_5, %c0_6] : memref<8x1xf32, #tpu.memory_space<vmem>>, vector<8x1xf32>
    tpu.vector_store %arg4[%c0_5, %c0_6], %12 {strides = array<i32>} : memref<8x1xf32, #tpu.memory_space<vmem>>, vector<8x1xf32>,
    return
  }
  func.func @transform_0(%arg0: i32) -> (i32, i32) {
    %c0_i32 = arith.constant 0 : i32
    %c0_i32_0 = arith.constant 0 : i32
    return %arg0, %c0_i32 : i32, i32
  }
  func.func @transform_1(%arg0: i32) -> (i32, i32) {
    %c0_i32 = arith.constant 0 : i32
    %c0_i32_0 = arith.constant 0 : i32
    %c0_i32_1 = arith.constant 0 : i32
    return %c0_i32, %c0_i32_0 : i32, i32
  }
  func.func @transform_2(%arg0: i32) -> i32 {
    %c0_i32 = arith.constant 0 : i32
    %c0_i32_0 = arith.constant 0 : i32
    return %c0_i32 : i32
  }
  func.func @transform_3(%arg0: i32) -> (i32, i32) {
    %c0_i32 = arith.constant 0 : i32
    %c0_i32_0 = arith.constant 0 : i32
    return %arg0, %c0_i32 : i32, i32
  }
}

</mosaic_0001>

<llo_original>
// kernel: tpu_custom_call.1
$region0: #{tpu_custom_call.1}
  #allocation0 [shape = 'u32[]', space=smem, size = 0x4, offset = 0x4, fixed_abs, tag = 'smem constant byte address 0x4 - core index']
  #allocation1 [shape = 'u32[144,128]{1,0:T(1,128)}', space=vmem, size = 0x12000, scoped, tag = 'internal scratch']
  #allocation2 [shape = 'f32[1]{0:T(128)S(6)}', space=smem, size = 0x200, scoped, tag = 'scoped memory for tpu_custom_call.1']
  %s0 = inlined_call_operand.hbm [shape: f32[8,32], index: 0, kind: input, shape index: {}]
  %s1 = inlined_call_operand.vmem [shape: f32[1,32], index: 1, kind: input, shape index: {}]
  %s2 = inlined_call_operand.<no memory space> [shape: f32[1], index: 2, kind: input, shape index: {}]
  %s3 = inlined_call_operand.vmem [shape: f32[8,1], index: 3, kind: output, shape index: {}]
  %s4 = sld [smem:[#allocation0]]
  $region26: #{tpu_custom_call.1} parent=0
    _
  %s6 = ssub.s32 1, %s4
  %s7 = scalar_select 0, %s6, %s4
  %8 = sst [smem:[#allocation2]] %s2
  $region1: #{tpu_custom_call.1} parent=0
    #allocation3 [shape = 'u8[4096]{0}', space=vmem, size = 0x1000, scoped, tag = 'input window, operand 0, single buffered']
    #allocation4 [shape = 's32[1]{0}', space=sflag, size = 0x4, scoped, tag = 'scoped memory for tpu_custom_call.1']
    %9 = vsyncpa [#allocation4], 0
    // Predicated region
    $region2: #{tpu_custom_call.1} parent=1 // pred_check
      _
    $region3: #{tpu_custom_call.1} parent=1 // pred_check_branch
      %11 = sbr.rel (0) target = $region5
    $region4: #{tpu_custom_call.1} parent=1 // pred_region
      %s13 = ssub.s32 128, 128
      %14 = vsyncadd [#allocation4], %s13
      %s16 = sshll.u32 [#allocation3], 4
      %s17 = int_to_ptr.vmem [resolvable:$true] %s16
      %19 = dma.hbm_to_vmem [thread:$0]  %s0, 128, %s17, [#allocation4]
    $region5: #{tpu_custom_call.1} parent=1 // pred_fallthru
      _
    // Predicated region
    $region6: #{tpu_custom_call.1} parent=1 // pred_check
      _
    $region7: #{tpu_custom_call.1} parent=1 // pred_check_branch
      %21 = sbr.rel (0) target = $region9
    $region8: #{tpu_custom_call.1} parent=1 // pred_region
      _
    $region9: #{tpu_custom_call.1} parent=1 // pred_fallthru
      _
    // Predicated region
    $region10: #{tpu_custom_call.1} parent=1 // pred_check
      _
    $region11: #{tpu_custom_call.1} parent=1 // pred_check_branch
      %23 = sbr.rel (0) target = $region13
    $region12: #{tpu_custom_call.1} parent=1 // pred_region
      _
    $region13: #{tpu_custom_call.1} parent=1 // pred_fallthru
      _
    // Predicated region
    $region14: #{tpu_custom_call.1} parent=1 // pred_check
      _
    $region15: #{tpu_custom_call.1} parent=1 // pred_check_branch
      %25 = sbr.rel (0) target = $region17
    $region16: #{tpu_custom_call.1} parent=1 // pred_region
      %26 = dma.done [#allocation4], 128
    $region17: #{tpu_custom_call.1} parent=1 // pred_fallthru
      _
    %v27 = vld [vmem:[#allocation3] sm:$0xff]
    %v28 = vld [vmem:[%s1] sm:$0x1]
    %v30 = vlaneseq
    %v31 = vshrl.u32 %v30, 7
    %v32 = vsub.s32 0, %v31
    %v33 = vrot.slane %v28, %v32
    %v35 = vsub.f32 %v27, %v33
    %v36 = vmul.f32 %v35, %v35
    %vm37 = vcmask 261120
    %v38 = vsel %vm37, %v36, 0.0
    %39 = vadd.xlane.f32.xlu0 %v38
    %v40 = vpop.xlane.xlu0 %39
    %v41 = vmul.f32 %v40, -0.5
    %v42 = vmul.f32 %v41, 1.442695
    %v43 = vpow.pop %v42
    %s44 = sld [smem:[#allocation2]]
    %v45 = vstv %s44
    %v46 = vsub.f32 %v43, %v45
    %vm47 = vcmask 7168
    %48 = vst.msk [vmem:[%s3] sm:$0xff] %vm47, %v46
    // Predicated region
    $region18: #{tpu_custom_call.1} parent=1 // pred_check
      _
    $region19: #{tpu_custom_call.1} parent=1 // pred_check_branch
      %50 = sbr.rel (0) target = $region21
    $region20: #{tpu_custom_call.1} parent=1 // pred_region
      _
    $region21: #{tpu_custom_call.1} parent=1 // pred_fallthru
      _
    // Predicated region
    $region22: #{tpu_custom_call.1} parent=1 // pred_check
      _
    $region23: #{tpu_custom_call.1} parent=1 // pred_check_branch
      %52 = sbr.rel (0) target = $region25
    $region24: #{tpu_custom_call.1} parent=1 // pred_region
      _
    $region25: #{tpu_custom_call.1} parent=1 // pred_fallthru
      _
    %53 = vsyncpa [#allocation4], 1

</llo_original>
